<compile_context>
chip_gen: v7x
topology: tpu7x:2x2x1
jax: 0.10.0
libtpu: 0.0.40
codegen_flags: <defaults>
</compile_context>

<pallas_src>
import functools
import math

import jax
import jax.numpy as jnp
from jax import lax
from jax.experimental import pallas as pl
from jax.experimental.pallas import tpu as pltpu

D_IN, D_H, D_OUT = 64, 30, 2
_CHUNK = 128          # rows per inner compute chunk (bounds vreg pressure)
_MIN_SPLIT = 256      # split into >=2 tiles (for v7x's 2 TCs) only above this


def _cdiv(a, b):
    return -(-a // b)


def _round_up(v, m):
    return (v + m - 1) // m * m


def _fcnet_kernel(x_ref, w1_ref, w2_ref, w3_ref, o_ref):
    """Linear -> ReLU -> Linear -> ReLU -> Linear over one [tb, 64] f32 slab."""
    tb = x_ref.shape[0]

    w1 = w1_ref[...]          # (64, 30) bf16, resident across the grid
    w2 = w2_ref[...]          # (30, 30) bf16
    w3 = w3_ref[...]          # (30, 2)  bf16

    def compute(x_f32):
        # Cast to bf16 in-kernel (single f32 HBM read; MXU runs single-pass bf16).
        xb = x_f32.astype(jnp.bfloat16)
        h1 = jnp.dot(xb, w1, preferred_element_type=jnp.float32)      # [c,30] f32
        h1 = jnp.maximum(h1, 0.0).astype(jnp.bfloat16)                # ReLU in f32, then cast
        h2 = jnp.dot(h1, w2, preferred_element_type=jnp.float32)      # [c,30] f32
        h2 = jnp.maximum(h2, 0.0).astype(jnp.bfloat16)
        return jnp.dot(h2, w3, preferred_element_type=jnp.float32)    # [c,2]  f32

    n_full, rem = divmod(tb, _CHUNK)          # static Python ints

    if n_full > 0:
        def body(j, carry):
            r = pl.multiple_of(j * _CHUNK, _CHUNK)
            o_ref[pl.ds(r, _CHUNK), :] = compute(
                x_ref[pl.ds(r, _CHUNK), :]).astype(o_ref.dtype)
            return carry

        lax.fori_loop(0, n_full, body, 0, unroll=min(8, n_full))

    if rem > 0:                                # static remainder chunk
        r0 = n_full * _CHUNK
        o_ref[pl.ds(r0, rem), :] = compute(
            x_ref[pl.ds(r0, rem), :]).astype(o_ref.dtype)


def _choose_tile(n, tile_b):
    """Pick a balanced row-tile size (multiple of 8 for f32 blocks, or == n)."""
    tile_b = max(8, tile_b)
    k = max(1, _cdiv(n, tile_b))
    if n >= _MIN_SPLIT:
        # Ensure >= 2 (balanced) tiles so the "parallel" grid axis can feed
        # both TensorCores on v7x.
        k = max(2, k)
    if k == 1:
        return n                  # single block == full array dims (any n OK)
    tb = _round_up(_cdiv(n, k), 8)
    return min(tb, _round_up(n, 8))


@functools.partial(jax.jit, static_argnames=("tile_b",))
def fcnet_forward(x, w1_t, w2_t, w3_t, *, tile_b=4096):
    """x: any shape with a multiple of 64 elements (== x.view(-1, 64)).
    w*_t: weights pre-transposed to (in_features, out_features).  Returns [N, 2] f32."""
    x2d = x.reshape(-1, D_IN).astype(jnp.float32)   # stays f32; kernel casts to bf16
    w1b = w1_t.astype(jnp.bfloat16)                 # weights are tiny; wrapper cast is free
    w2b = w2_t.astype(jnp.bfloat16)
    w3b = w3_t.astype(jnp.bfloat16)

    n = x2d.shape[0]
    tb = _choose_tile(n, tile_b)
    grid = (_cdiv(n, tb),)        # ragged last block handled/masked by Pallas

    out = pl.pallas_call(
        _fcnet_kernel,
        out_shape=jax.ShapeDtypeStruct((n, D_OUT), jnp.float32),
        grid_spec=pltpu.PrefetchScalarGridSpec(
            num_scalar_prefetch=0,
            grid=grid,
            in_specs=[
                pl.BlockSpec((tb, D_IN), lambda i: (i, 0)),    # x tile (f32)
                pl.BlockSpec((D_IN, D_H), lambda i: (0, 0)),   # W1^T (64,30), resident
                pl.BlockSpec((D_H, D_H), lambda i: (0, 0)),    # W2^T (30,30), resident
                pl.BlockSpec((D_H, D_OUT), lambda i: (0, 0)),  # W3^T (30,2),  resident
            ],
            out_specs=pl.BlockSpec((tb, D_OUT), lambda i: (i, 0)),
        ),
        compiler_params=pltpu.CompilerParams(
            dimension_semantics=("parallel",),    # shard batch tiles across v7x's 2 TCs
            vmem_limit_bytes=32 * 1024 * 1024,
        ),
    )(x2d, w1b, w2b, w3b)

    return out


def init_fcnet_params(key):
    """Deterministic init mimicking PyTorch Linear default (bound = 1/sqrt(fan_in)).
    Weights stored as (out, in) like nn.Linear; transposed once by the caller."""
    k1, k2, k3 = jax.random.split(key, 3)

    def uni(k, out_f, in_f):
        bound = 1.0 / math.sqrt(in_f)
        return jax.random.uniform(k, (out_f, in_f), jnp.float32, -bound, bound)

    return uni(k1, D_H, D_IN), uni(k2, D_H, D_H), uni(k3, D_OUT, D_H)


def fcnet_reference(x, w1, w2, w3):
    """Pure-JAX reference using the same numerics recipe as the kernel
    (bf16 operands, f32 accumulation) so tolerances stay tight."""
    xb = x.reshape(-1, D_IN).astype(jnp.bfloat16)
    w1b, w2b, w3b = (w.astype(jnp.bfloat16) for w in (w1, w2, w3))
    h1 = jnp.maximum(jnp.dot(xb, w1b.T, preferred_element_type=jnp.float32), 0.0)
    h1 = h1.astype(jnp.bfloat16)
    h2 = jnp.maximum(jnp.dot(h1, w2b.T, preferred_element_type=jnp.float32), 0.0)
    h2 = h2.astype(jnp.bfloat16)
    return jnp.dot(h2, w3b.T, preferred_element_type=jnp.float32)


if __name__ == "__main__":
    key = jax.random.PRNGKey(0)
    kx, kb, kp = jax.random.split(key, 3)

    w1, w2, w3 = init_fcnet_params(kp)

    # MNIST-like small input: [batch, 1, 8, 8] -> view(-1, 64) -> [200, 64]
    x = jax.random.normal(kx, (200, 1, 8, 8), dtype=jnp.float32)
    ref = fcnet_reference(x, w1, w2, w3)

    # Default path: 200 rows < 256 -> single full-batch tile (grid=1).
    out_default = jax.block_until_ready(fcnet_forward(x, w1.T, w2.T, w3.T))

    # Forced multi-tile path: balanced 56-row tiles, grid=4, ragged last block.
    out_tiled = jax.block_until_ready(fcnet_forward(x, w1.T, w2.T, w3.T, tile_b=64))

    assert out_default.shape == (200, D_OUT), out_default.shape
    assert out_tiled.shape == (200, D_OUT), out_tiled.shape
    assert jnp.allclose(out_default, ref, atol=2e-2, rtol=2e-2), "mismatch (default tile)"
    assert jnp.allclose(out_tiled, ref, atol=2e-2, rtol=2e-2), "mismatch (tile_b=64)"

    # Larger batch: exercises the >=2-tile split (v7x balance), the 128-row
    # inner chunk loop AND the static remainder chunk (640 -> 2 tiles of 320).
    xb_ = jax.random.normal(kb, (640, D_IN), dtype=jnp.float32)
    ref_b = fcnet_reference(xb_, w1, w2, w3)
    out_b = jax.block_until_ready(fcnet_forward(xb_, w1.T, w2.T, w3.T))
    assert out_b.shape == (640, D_OUT), out_b.shape
    assert jnp.allclose(out_b, ref_b, atol=2e-2, rtol=2e-2), "mismatch (640-row batch)"

    print("KERNEL_OK")
</pallas_src>

<mosaic_0001>
module attributes {stable_mosaic.version = 11 : i64} {
  func.func @_fcnet_kernel(%arg0: i32, %arg1: memref<200x64xf32, #tpu.memory_space<vmem>>, %arg2: memref<64x30xbf16, #tpu.memory_space<vmem>>, %arg3: memref<30x30xbf16, #tpu.memory_space<vmem>>, %arg4: memref<30x2xbf16, #tpu.memory_space<vmem>>, %arg5: memref<200x2xf32, #tpu.memory_space<vmem>>) attributes {dimension_semantics = [#tpu.dimension_semantics<parallel>], iteration_bounds = array<i64: 1>, scalar_prefetch = 0 : i64, scratch_operands = 0 : i64, tpu.core_type = #tpu.core_type<tc>, window_params = [{transform_indices = @transform_0, window_bounds = array<i64: 200, 64>}, {pipeline_mode = #tpu.pipeline_mode<synchronous>, transform_indices = @transform_1, window_bounds = array<i64: 64, 30>}, {pipeline_mode = #tpu.pipeline_mode<synchronous>, transform_indices = @transform_2, window_bounds = array<i64: 30, 30>}, {pipeline_mode = #tpu.pipeline_mode<synchronous>, transform_indices = @transform_3, window_bounds = array<i64: 30, 2>}, {transform_indices = @transform_4, window_bounds = array<i64: 200, 2>}]} {
    %c0 = arith.constant 0 : index
    %c0_0 = arith.constant 0 : index
    %0 = vector.load %arg2[%c0, %c0_0] : memref<64x30xbf16, #tpu.memory_space<vmem>>, vector<64x30xbf16>
    %c0_1 = arith.constant 0 : index
    %c0_2 = arith.constant 0 : index
    %1 = vector.load %arg3[%c0_1, %c0_2] : memref<30x30xbf16, #tpu.memory_space<vmem>>, vector<30x30xbf16>
    %c0_3 = arith.constant 0 : index
    %c0_4 = arith.constant 0 : index
    %2 = vector.load %arg4[%c0_3, %c0_4] : memref<30x2xbf16, #tpu.memory_space<vmem>>, vector<30x2xbf16>
    %c0_i32 = arith.constant 0 : i32
    %c128_i32 = arith.constant 128 : i32
    %3 = arith.muli %c0_i32, %c128_i32 : i32
    %4 = tpu.assume_multiple %3, 128 : i32
    %5 = arith.index_cast %4 : i32 to index
    %c0_5 = arith.constant 0 : index
    %6 = vector.load %arg1[%5, %c0_5] : memref<200x64xf32, #tpu.memory_space<vmem>>, vector<128x64xf32>
    %7 = arith.truncf %6 : vector<128x64xf32> to vector<128x64xbf16>
    %cst = arith.constant dense<0.000000e+00> : vector<128x30xf32>
    %8 = tpu.matmul %7, %0, %cst {dimension_numbers = #tpu.dot_dimension_numbers<[1], [0], [0], [1], [0, 0, 1, 1], [], []>} : vector<128x64xbf16>, vector<64x30xbf16>, vector<128x30xf32> -> vector<128x30xf32>
    %cst_6 = arith.constant 0.000000e+00 : f32
    %9 = vector.broadcast %cst_6 : f32 to vector<128x30xf32>
    %10 = arith.maximumf %8, %9 : vector<128x30xf32>
    %11 = arith.truncf %10 : vector<128x30xf32> to vector<128x30xbf16>
    %cst_7 = arith.constant dense<0.000000e+00> : vector<128x30xf32>
    %12 = tpu.matmul %11, %1, %cst_7 {dimension_numbers = #tpu.dot_dimension_numbers<[1], [0], [0], [1], [0, 0, 1, 1], [], []>} : vector<128x30xbf16>, vector<30x30xbf16>, vector<128x30xf32> -> vector<128x30xf32>
    %cst_8 = arith.constant 0.000000e+00 : f32
    %13 = vector.broadcast %cst_8 : f32 to vector<128x30xf32>
    %14 = arith.maximumf %12, %13 : vector<128x30xf32>
    %15 = arith.truncf %14 : vector<128x30xf32> to vector<128x30xbf16>
    %cst_9 = arith.constant dense<0.000000e+00> : vector<128x2xf32>
    %16 = tpu.matmul %15, %2, %cst_9 {dimension_numbers = #tpu.dot_dimension_numbers<[1], [0], [0], [1], [0, 0, 1, 1], [], []>} : vector<128x30xbf16>, vector<30x2xbf16>, vector<128x2xf32> -> vector<128x2xf32>
    %17 = arith.index_cast %4 : i32 to index
    %c0_10 = arith.constant 0 : index
    %18 = vector.load %arg5[%17, %c0_10] : memref<200x2xf32, #tpu.memory_space<vmem>>, vector<128x2xf32>
    tpu.vector_store %arg5[%17, %c0_10], %16 {strides = array<i32>} : memref<200x2xf32, #tpu.memory_space<vmem>>, vector<128x2xf32>,
    %c1_i32 = arith.constant 1 : i32
    %c128 = arith.constant 128 : index
    %c0_11 = arith.constant 0 : index
    %19 = vector.load %arg1[%c128, %c0_11] : memref<200x64xf32, #tpu.memory_space<vmem>>, vector<72x64xf32>
    %20 = arith.truncf %19 : vector<72x64xf32> to vector<72x64xbf16>
    %cst_12 = arith.constant dense<0.000000e+00> : vector<72x30xf32>
    %21 = tpu.matmul %20, %0, %cst_12 {dimension_numbers = #tpu.dot_dimension_numbers<[1], [0], [0], [1], [0, 0, 1, 1], [], []>} : vector<72x64xbf16>, vector<64x30xbf16>, vector<72x30xf32> -> vector<72x30xf32>
    %cst_13 = arith.constant 0.000000e+00 : f32
    %22 = vector.broadcast %cst_13 : f32 to vector<72x30xf32>
    %23 = arith.maximumf %21, %22 : vector<72x30xf32>
    %24 = arith.truncf %23 : vector<72x30xf32> to vector<72x30xbf16>
    %cst_14 = arith.constant dense<0.000000e+00> : vector<72x30xf32>
    %25 = tpu.matmul %24, %1, %cst_14 {dimension_numbers = #tpu.dot_dimension_numbers<[1], [0], [0], [1], [0, 0, 1, 1], [], []>} : vector<72x30xbf16>, vector<30x30xbf16>, vector<72x30xf32> -> vector<72x30xf32>
    %cst_15 = arith.constant 0.000000e+00 : f32
    %26 = vector.broadcast %cst_15 : f32 to vector<72x30xf32>
    %27 = arith.maximumf %25, %26 : vector<72x30xf32>
    %28 = arith.truncf %27 : vector<72x30xf32> to vector<72x30xbf16>
    %cst_16 = arith.constant dense<0.000000e+00> : vector<72x2xf32>
    %29 = tpu.matmul %28, %2, %cst_16 {dimension_numbers = #tpu.dot_dimension_numbers<[1], [0], [0], [1], [0, 0, 1, 1], [], []>} : vector<72x30xbf16>, vector<30x2xbf16>, vector<72x2xf32> -> vector<72x2xf32>
    %c128_17 = arith.constant 128 : index
    %c0_18 = arith.constant 0 : index
    %30 = vector.load %arg5[%c128_17, %c0_18] : memref<200x2xf32, #tpu.memory_space<vmem>>, vector<72x2xf32>
    tpu.vector_store %arg5[%c128_17, %c0_18], %29 {strides = array<i32>} : memref<200x2xf32, #tpu.memory_space<vmem>>, vector<72x2xf32>,
    return
  }
  func.func @transform_0(%arg0: i32) -> (i32, i32) {
    %c0_i32 = arith.constant 0 : i32
    %c0_i32_0 = arith.constant 0 : i32
    return %arg0, %c0_i32 : i32, i32
  }
  func.func @transform_1(%arg0: i32) -> (i32, i32) {
    %c0_i32 = arith.constant 0 : i32
    %c0_i32_0 = arith.constant 0 : i32
    %c0_i32_1 = arith.constant 0 : i32
    return %c0_i32, %c0_i32_0 : i32, i32
  }
  func.func @transform_2(%arg0: i32) -> (i32, i32) {
    %c0_i32 = arith.constant 0 : i32
    %c0_i32_0 = arith.constant 0 : i32
    %c0_i32_1 = arith.constant 0 : i32
    return %c0_i32, %c0_i32_0 : i32, i32
  }
  func.func @transform_3(%arg0: i32) -> (i32, i32) {
    %c0_i32 = arith.constant 0 : i32
    %c0_i32_0 = arith.constant 0 : i32
    %c0_i32_1 = arith.constant 0 : i32
    return %c0_i32, %c0_i32_0 : i32, i32
  }
  func.func @transform_4(%arg0: i32) -> (i32, i32) {
    %c0_i32 = arith.constant 0 : i32
    %c0_i32_0 = arith.constant 0 : i32
    return %arg0, %c0_i32 : i32, i32
  }
}

</mosaic_0001>

<llo_original>
// kernel: fcnet_forward.1
$region0: #{fcnet_forward.1}
  #allocation0 [shape = 'u32[]', space=smem, size = 0x4, offset = 0x4, fixed_abs, tag = 'smem constant byte address 0x4 - core index']
  #allocation1 [shape = 'u32[144,128]{1,0:T(1,128)}', space=vmem, size = 0x12000, scoped, tag = 'internal scratch']
  %s0 = inlined_call_operand.vmem [shape: f32[200,64], index: 0, kind: input, shape index: {}]
  %s1 = inlined_call_operand.vmem [shape: bf16[64,30], index: 1, kind: input, shape index: {}]
  %s2 = inlined_call_operand.vmem [shape: bf16[30,30], index: 2, kind: input, shape index: {}]
  %s3 = inlined_call_operand.vmem [shape: bf16[30,2], index: 3, kind: input, shape index: {}]
  %s4 = inlined_call_operand.vmem [shape: f32[200,2], index: 4, kind: output, shape index: {}]
  %s5 = sld [smem:[#allocation0]]
  $region26: #{fcnet_forward.1} parent=0
    _
  %s7 = ssub.s32 1, %s5
  %s8 = scalar_select 0, %s7, %s5
  // Predicated region
  $region2: #{fcnet_forward.1} parent=0 // pred_check
    _
  $region3: #{fcnet_forward.1} parent=0 // pred_check_branch
    %10 = sbr.rel (0) target = $region5
  $region4: #{fcnet_forward.1} parent=0 // pred_region
    _
  $region5: #{fcnet_forward.1} parent=0 // pred_fallthru
    _
  // Predicated region
  $region6: #{fcnet_forward.1} parent=0 // pred_check
    _
  $region7: #{fcnet_forward.1} parent=0 // pred_check_branch
    %12 = sbr.rel (0) target = $region9
  $region8: #{fcnet_forward.1} parent=0 // pred_region
    _
  $region9: #{fcnet_forward.1} parent=0 // pred_fallthru
    _
  // Predicated region
  $region10: #{fcnet_forward.1} parent=0 // pred_check
    _
  $region11: #{fcnet_forward.1} parent=0 // pred_check_branch
    %14 = sbr.rel (0) target = $region13
  $region12: #{fcnet_forward.1} parent=0 // pred_region
    _
  $region13: #{fcnet_forward.1} parent=0 // pred_fallthru
    _
  // Predicated region
  $region14: #{fcnet_forward.1} parent=0 // pred_check
    _
  $region15: #{fcnet_forward.1} parent=0 // pred_check_branch
    %16 = sbr.rel (0) target = $region17
  $region16: #{fcnet_forward.1} parent=0 // pred_region
    _
  $region17: #{fcnet_forward.1} parent=0 // pred_fallthru
    _
  %v18 = vld [vmem:[%s1] sm:$0xf]
  %v19 = vld [vmem:[%s1 + $0x4] sm:$0xf]
  %v20 = vld [vmem:[%s1 + $0x8] sm:$0xf]
  %v21 = vld [vmem:[%s1 + $0xc] sm:$0xf]
  %v22 = vld [vmem:[%s1 + $0x10] sm:$0xf]
  %v23 = vld [vmem:[%s1 + $0x14] sm:$0xf]
  %v24 = vld [vmem:[%s1 + $0x18] sm:$0xf]
  %v25 = vld [vmem:[%s1 + $0x1c] sm:$0xf]
  %v26 = vld [vmem:[%s2] sm:$0xf]
  %v27 = vld [vmem:[%s2 + $0x4] sm:$0xf]
  %v28 = vld [vmem:[%s2 + $0x8] sm:$0xf]
  %v29 = vld [vmem:[%s2 + $0xc] sm:$0x7]
  %v30 = vld [vmem:[%s3] sm:$0xf]
  %v31 = vld [vmem:[%s3 + $0x4] sm:$0xf]
  %v32 = vld [vmem:[%s3 + $0x8] sm:$0xf]
  %v33 = vld [vmem:[%s3 + $0xc] sm:$0x7]
  %v34 = vld [vmem:[%s0] sm:$0xff]
  %v35 = vld [vmem:[%s0 + $0x8] sm:$0xff]
  %v36 = vld [vmem:[%s0 + $0x10] sm:$0xff]
  %v37 = vld [vmem:[%s0 + $0x18] sm:$0xff]
  %v38 = vld [vmem:[%s0 + $0x20] sm:$0xff]
  %v39 = vld [vmem:[%s0 + $0x28] sm:$0xff]
  %v40 = vld [vmem:[%s0 + $0x30] sm:$0xff]
  %v41 = vld [vmem:[%s0 + $0x38] sm:$0xff]
  %v42 = vld [vmem:[%s0 + $0x40] sm:$0xff]
  %v43 = vld [vmem:[%s0 + $0x48] sm:$0xff]
  %v44 = vld [vmem:[%s0 + $0x50] sm:$0xff]
  %v45 = vld [vmem:[%s0 + $0x58] sm:$0xff]
  %v46 = vld [vmem:[%s0 + $0x60] sm:$0xff]
  %v47 = vld [vmem:[%s0 + $0x68] sm:$0xff]
  %v48 = vld [vmem:[%s0 + $0x70] sm:$0xff]
  %v49 = vld [vmem:[%s0 + $0x78] sm:$0xff]
  %v50 = vpack.c.bf16 %v35, %v34
  %v51 = vpack.c.bf16 %v37, %v36
  %v52 = vpack.c.bf16 %v39, %v38
  %v53 = vpack.c.bf16 %v41, %v40
  %v54 = vpack.c.bf16 %v43, %v42
  %v55 = vpack.c.bf16 %v45, %v44
  %v56 = vpack.c.bf16 %v47, %v46
  %v57 = vpack.c.bf16 %v49, %v48
  %v66 = vunpack.c.l.b16 %v18
  %v67 = vunpack.c.l.b16 %v19
  %v68 = vunpack.c.l.b16 %v20
  %v69 = vunpack.c.l.b16 %v21
  %v70 = vunpack.c.l.b16 %v22
  %v71 = vunpack.c.l.b16 %v23
  %v72 = vunpack.c.l.b16 %v24
  %v73 = vunpack.c.l.b16 %v25
  %v74 = vpack.c.b16 %v67, %v66
  %v75 = vpack.c.b16 %v69, %v68
  %v76 = vpack.c.b16 %v71, %v70
  %v77 = vpack.c.b16 %v73, %v72
  %vm82 = vcmask 523264
  %v84 = vsel %vm82, %v50, 0
  %v87 = vsel %vm82, %v51, 0
  %v90 = vsel %vm82, %v52, 0
  %v93 = vsel %vm82, %v53, 0
  %v96 = vsel %vm82, %v54, 0
  %v99 = vsel %vm82, %v55, 0
  %v102 = vsel %vm82, %v56, 0
  %v105 = vsel %vm82, %v57, 0
  %107 = vmatprep.subr.bf16.mxu0 0
  %108 = vmatpush1.bf16.msra.mxu0 %v74
  %109 = vmatprep.subr.bf16.mxu0 0
  %110 = vmatpush1.bf16.msra.mxu0 %v75
  %111 = vmatprep.subr.bf16.mxu0 0
  %112 = vmatpush1.bf16.msra.mxu0 %v76
  %113 = vmatprep.subr.bf16.mxu0 0
  %114 = vmatpush1.bf16.msra.mxu0 %v77
  %115 = vmatprep.subr.bf16.mxu0 0
  %116 = vmatpush1.bf16.msra.mxu0 0
  %117 = vmatprep.subr.bf16.mxu0 0
  %118 = vmatpush1.bf16.msra.mxu0 0
  %119 = vmatprep.subr.bf16.mxu0 0
  %120 = vmatpush1.bf16.msra.mxu0 0
  %121 = vmatprep.subr.bf16.mxu0 0
  %122 = vmatpush1.bf16.msra.mxu0 0
  %123 = vmatprep.subr.bf16.mxu0 0
  %124 = vmatpush1.bf16.msra.mxu0 0
  %125 = vmatprep.subr.bf16.mxu0 0
  %126 = vmatpush1.bf16.msra.mxu0 0
  %127 = vmatprep.subr.bf16.mxu0 0
  %128 = vmatpush1.bf16.msra.mxu0 0
  %129 = vmatprep.subr.bf16.mxu0 0
  %130 = vmatpush1.bf16.msra.mxu0 0
  %131 = vmatprep.subr.bf16.mxu0 0
  %132 = vmatpush1.bf16.msra.mxu0 0
  %133 = vmatprep.subr.bf16.mxu0 0
  %134 = vmatpush1.bf16.msra.mxu0 0
  %135 = vmatprep.subr.bf16.mxu0 0
  %136 = vmatpush1.bf16.msra.mxu0 0
  %137 = vmatprep.subr.bf16.mxu0 0
  %138 = vmatpush1.bf16.msra.mxu0 0
  %139 = vmatprep.mubr.bf16.mxu0 0
  %140 = vmatmul.mubr.bf16.gmra.mrb[0].mxu0 %v84
  %v141 = vpop.f32.mrb[0].mxu0
  %v142 = vadd.f32 0.0, %v141
  %v143 = vpop.f32.mrb[0].mxu0
  %v144 = vpop.f32.mrb[0].mxu0
  %v145 = vadd.f32 0.0, %v144
  %v146 = vpop.f32.mrb[0].mxu0
  %147 = vmatprep.mubr.bf16.mxu0 0
  %148 = vmatmul.mubr.bf16.gmra.mrb[0].mxu0 %v87
  %v149 = vpop.f32.mrb[0].mxu0
  %v150 = vadd.f32 0.0, %v149
  %v151 = vpop.f32.mrb[0].mxu0
  %v152 = vpop.f32.mrb[0].mxu0
  %v153 = vadd.f32 0.0, %v152
  %v154 = vpop.f32.mrb[0].mxu0
  %155 = vmatprep.mubr.bf16.mxu0 0
  %156 = vmatmul.mubr.bf16.gmra.mrb[0].mxu0 %v90
  %v157 = vpop.f32.mrb[0].mxu0
  %v158 = vadd.f32 0.0, %v157
  %v159 = vpop.f32.mrb[0].mxu0
  %v160 = vpop.f32.mrb[0].mxu0
  %v161 = vadd.f32 0.0, %v160
  %v162 = vpop.f32.mrb[0].mxu0
  %163 = vmatprep.mubr.bf16.mxu0 0
  %164 = vmatmul.mubr.bf16.gmra.mrb[0].mxu0 %v93
  %v165 = vpop.f32.mrb[0].mxu0
  %v166 = vadd.f32 0.0, %v165
  %v167 = vpop.f32.mrb[0].mxu0
  %v168 = vpop.f32.mrb[0].mxu0
  %v169 = vadd.f32 0.0, %v168
  %v170 = vpop.f32.mrb[0].mxu0
  %171 = vmatprep.mubr.bf16.mxu0 0
  %172 = vmatmul.mubr.bf16.gmra.mrb[0].mxu0 %v96
  %v173 = vpop.f32.mrb[0].mxu0
  %v174 = vadd.f32 0.0, %v173
  %v175 = vpop.f32.mrb[0].mxu0
  %v176 = vpop.f32.mrb[0].mxu0
  %v177 = vadd.f32 0.0, %v176
  %v178 = vpop.f32.mrb[0].mxu0
  %179 = vmatprep.mubr.bf16.mxu0 0
  %180 = vmatmul.mubr.bf16.gmra.mrb[0].mxu0 %v99
  %v181 = vpop.f32.mrb[0].mxu0
  %v182 = vadd.f32 0.0, %v181
  %v183 = vpop.f32.mrb[0].mxu0
  %v184 = vpop.f32.mrb[0].mxu0
  %v185 = vadd.f32 0.0, %v184
  %v186 = vpop.f32.mrb[0].mxu0
  %187 = vmatprep.mubr.bf16.mxu0 0
  %188 = vmatmul.mubr.bf16.gmra.mrb[0].mxu0 %v102
  %v189 = vpop.f32.mrb[0].mxu0
  %v190 = vadd.f32 0.0, %v189
  %v191 = vpop.f32.mrb[0].mxu0
  %v192 = vpop.f32.mrb[0].mxu0
  %v193 = vadd.f32 0.0, %v192
  %v194 = vpop.f32.mrb[0].mxu0
  %195 = vmatprep.mubr.bf16.mxu0 0
  %196 = vmatmul.mubr.bf16.gmra.mrb[0].mxu0 %v105
  %v197 = vpop.f32.mrb[0].mxu0
  %v198 = vadd.f32 0.0, %v197
  %v199 = vpop.f32.mrb[0].mxu0
  %v200 = vpop.f32.mrb[0].mxu0
  %v201 = vadd.f32 0.0, %v200
  %v202 = vpop.f32.mrb[0].mxu0
  %203 = vdwg.mxu0
  %v204 = vmax.f32 %v142, 0.0
  %v205 = vmax.f32 %v145, 0.0
  %v206 = vmax.f32 %v150, 0.0
  %v207 = vmax.f32 %v153, 0.0
  %v208 = vmax.f32 %v158, 0.0
  %v209 = vmax.f32 %v161, 0.0
  %v210 = vmax.f32 %v166, 0.0
  %v211 = vmax.f32 %v169, 0.0
  %v212 = vmax.f32 %v174, 0.0
  %v213 = vmax.f32 %v177, 0.0
  %v214 = vmax.f32 %v182, 0.0
  %v215 = vmax.f32 %v185, 0.0
  %v216 = vmax.f32 %v190, 0.0
  %v217 = vmax.f32 %v193, 0.0
  %v218 = vmax.f32 %v198, 0.0
  %v219 = vmax.f32 %v201, 0.0
  %v220 = vpack.c.bf16 %v205, %v204
  %v221 = vpack.c.bf16 %v207, %v206
  %v222 = vpack.c.bf16 %v209, %v208
  %v223 = vpack.c.bf16 %v211, %v210
  %v224 = vpack.c.bf16 %v213, %v212
  %v225 = vpack.c.bf16 %v215, %v214
  %v226 = vpack.c.bf16 %v217, %v216
  %v227 = vpack.c.bf16 %v219, %v218
  %v232 = vunpack.c.l.b16 %v26
  %v233 = vunpack.c.l.b16 %v27
  %v234 = vunpack.c.l.b16 %v28
  %v235 = vunpack.c.l.b16 %v29
  %v236 = vpack.c.b16 %v233, %v232
  %v237 = vpack.c.b16 %v235, %v234
  %vm239 = vcmask 244736
  %v241 = vsel %vm239, %v220, 0
  %v244 = vsel %vm239, %v221, 0
  %v247 = vsel %vm239, %v222, 0
  %v250 = vsel %vm239, %v223, 0
  %v253 = vsel %vm239, %v224, 0
  %v256 = vsel %vm239, %v225, 0
  %v259 = vsel %vm239, %v226, 0
  %v262 = vsel %vm239, %v227, 0
  %vm264 = vcmask 1046528
  %v266 = vsel %vm264, %v237, 0
  %268 = vmatprep.subr.bf16.mxu0 0
  %269 = vmatpush1.bf16.msra.mxu0 %v236
  %270 = vmatprep.subr.bf16.mxu0 0
  %271 = vmatpush1.bf16.msra.mxu0 %v266
  %272 = vmatprep.subr.bf16.mxu0 0
  %273 = vmatpush1.bf16.msra.mxu0 0
  %274 = vmatprep.subr.bf16.mxu0 0
  %275 = vmatpush1.bf16.msra.mxu0 0
  %276 = vmatprep.subr.bf16.mxu0 0
  %277 = vmatpush1.bf16.msra.mxu0 0
  %278 = vmatprep.subr.bf16.mxu0 0
  %279 = vmatpush1.bf16.msra.mxu0 0
  %280 = vmatprep.subr.bf16.mxu0 0
  %281 = vmatpush1.bf16.msra.mxu0 0
  %282 = vmatprep.subr.bf16.mxu0 0
  %283 = vmatpush1.bf16.msra.mxu0 0
  %284 = vmatprep.subr.bf16.mxu0 0
  %285 = vmatpush1.bf16.msra.mxu0 0
  %286 = vmatprep.subr.bf16.mxu0 0
  %287 = vmatpush1.bf16.msra.mxu0 0
  %288 = vmatprep.subr.bf16.mxu0 0
  %289 = vmatpush1.bf16.msra.mxu0 0
  %290 = vmatprep.subr.bf16.mxu0 0
  %291 = vmatpush1.bf16.msra.mxu0 0
  %292 = vmatprep.subr.bf16.mxu0 0
  %293 = vmatpush1.bf16.msra.mxu0 0
  %294 = vmatprep.subr.bf16.mxu0 0
  %295 = vmatpush1.bf16.msra.mxu0 0
  %296 = vmatprep.subr.bf16.mxu0 0
  %297 = vmatpush1.bf16.msra.mxu0 0
  %298 = vmatprep.subr.bf16.mxu0 0
  %299 = vmatpush1.bf16.msra.mxu0 0
  %300 = vmatprep.mubr.bf16.mxu0 0
  %301 = vmatmul.mubr.bf16.gmra.mrb[0].mxu0 %v241
  %v302 = vpop.f32.mrb[0].mxu0
  %v303 = vadd.f32 0.0, %v302
  %v304 = vpop.f32.mrb[0].mxu0
  %v305 = vpop.f32.mrb[0].mxu0
  %v306 = vadd.f32 0.0, %v305
  %v307 = vpop.f32.mrb[0].mxu0
  %308 = vmatprep.mubr.bf16.mxu0 0
  %309 = vmatmul.mubr.bf16.gmra.mrb[0].mxu0 %v244
  %v310 = vpop.f32.mrb[0].mxu0
  %v311 = vadd.f32 0.0, %v310
  %v312 = vpop.f32.mrb[0].mxu0
  %v313 = vpop.f32.mrb[0].mxu0
  %v314 = vadd.f32 0.0, %v313
  %v315 = vpop.f32.mrb[0].mxu0
  %316 = vmatprep.mubr.bf16.mxu0 0
  %317 = vmatmul.mubr.bf16.gmra.mrb[0].mxu0 %v247
  %v318 = vpop.f32.mrb[0].mxu0
  %v319 = vadd.f32 0.0, %v318
  %v320 = vpop.f32.mrb[0].mxu0
  %v321 = vpop.f32.mrb[0].mxu0
  %v322 = vadd.f32 0.0, %v321
  %v323 = vpop.f32.mrb[0].mxu0
  %324 = vmatprep.mubr.bf16.mxu0 0
  %325 = vmatmul.mubr.bf16.gmra.mrb[0].mxu0 %v250
  %v326 = vpop.f32.mrb[0].mxu0
  %v327 = vadd.f32 0.0, %v326
  %v328 = vpop.f32.mrb[0].mxu0
  %v329 = vpop.f32.mrb[0].mxu0
  %v330 = vadd.f32 0.0, %v329
  %v331 = vpop.f32.mrb[0].mxu0
  %332 = vmatprep.mubr.bf16.mxu0 0
  %333 = vmatmul.mubr.bf16.gmra.mrb[0].mxu0 %v253
  %v334 = vpop.f32.mrb[0].mxu0
  %v335 = vadd.f32 0.0, %v334
  %v336 = vpop.f32.mrb[0].mxu0
  %v337 = vpop.f32.mrb[0].mxu0
  %v338 = vadd.f32 0.0, %v337
  %v339 = vpop.f32.mrb[0].mxu0
  %340 = vmatprep.mubr.bf16.mxu0 0
  %341 = vmatmul.mubr.bf16.gmra.mrb[0].mxu0 %v256
  %v342 = vpop.f32.mrb[0].mxu0
  %v343 = vadd.f32 0.0, %v342
  %v344 = vpop.f32.mrb[0].mxu0
  %v345 = vpop.f32.mrb[0].mxu0
  %v346 = vadd.f32 0.0, %v345
  %v347 = vpop.f32.mrb[0].mxu0
  %348 = vmatprep.mubr.bf16.mxu0 0
  %349 = vmatmul.mubr.bf16.gmra.mrb[0].mxu0 %v259
  %v350 = vpop.f32.mrb[0].mxu0
  %v351 = vadd.f32 0.0, %v350
  %v352 = vpop.f32.mrb[0].mxu0
  %v353 = vpop.f32.mrb[0].mxu0
  %v354 = vadd.f32 0.0, %v353
  %v355 = vpop.f32.mrb[0].mxu0
  %356 = vmatprep.mubr.bf16.mxu0 0
  %357 = vmatmul.mubr.bf16.gmra.mrb[0].mxu0 %v262
  %v358 = vpop.f32.mrb[0].mxu0
  %v359 = vadd.f32 0.0, %v358
  %v360 = vpop.f32.mrb[0].mxu0
  %v361 = vpop.f32.mrb[0].mxu0
  %v362 = vadd.f32 0.0, %v361
  %v363 = vpop.f32.mrb[0].mxu0
  %364 = vdwg.mxu0
  %v365 = vmax.f32 %v303, 0.0
  %v366 = vmax.f32 %v306, 0.0
  %v367 = vmax.f32 %v311, 0.0
  %v368 = vmax.f32 %v314, 0.0
  %v369 = vmax.f32 %v319, 0.0
  %v370 = vmax.f32 %v322, 0.0
  %v371 = vmax.f32 %v327, 0.0
  %v372 = vmax.f32 %v330, 0.0
  %v373 = vmax.f32 %v335, 0.0
  %v374 = vmax.f32 %v338, 0.0
  %v375 = vmax.f32 %v343, 0.0
  %v376 = vmax.f32 %v346, 0.0
  %v377 = vmax.f32 %v351, 0.0
  %v378 = vmax.f32 %v354, 0.0
  %v379 = vmax.f32 %v359, 0.0
  %v380 = vmax.f32 %v362, 0.0
  %v381 = vpack.c.bf16 %v366, %v365
  %v382 = vpack.c.bf16 %v368, %v367
  %v383 = vpack.c.bf16 %v370, %v369
  %v384 = vpack.c.bf16 %v372, %v371
  %v385 = vpack.c.bf16 %v374, %v373
  %v386 = vpack.c.bf16 %v376, %v375
  %v387 = vpack.c.bf16 %v378, %v377
  %v388 = vpack.c.bf16 %v380, %v379
  %v393 = vunpack.c.l.b16 %v30
  %v394 = vunpack.c.l.b16 %v31
  %v395 = vunpack.c.l.b16 %v32
  %v396 = vunpack.c.l.b16 %v33
  %v397 = vpack.c.b16 %v394, %v393
  %v398 = vpack.c.b16 %v396, %v395
  %v401 = vsel %vm239, %v381, 0
  %v404 = vsel %vm239, %v382, 0
  %v407 = vsel %vm239, %v383, 0
  %v410 = vsel %vm239, %v384, 0
  %v413 = vsel %vm239, %v385, 0
  %v416 = vsel %vm239, %v386, 0
  %v419 = vsel %vm239, %v387, 0
  %v422 = vsel %vm239, %v388, 0
  %v425 = vsel %vm264, %v398, 0
  %427 = vmatprep.subr.bf16.mxu0 0
  %428 = vmatpush1.bf16.msra.mxu0 %v397
  %429 = vmatprep.subr.bf16.mxu0 0
  %430 = vmatpush1.bf16.msra.mxu0 %v425
  %431 = vmatprep.subr.bf16.mxu0 0
  %432 = vmatpush1.bf16.msra.mxu0 0
  %433 = vmatprep.subr.bf16.mxu0 0
  %434 = vmatpush1.bf16.msra.mxu0 0
  %435 = vmatprep.subr.bf16.mxu0 0
  %436 = vmatpush1.bf16.msra.mxu0 0
  %437 = vmatprep.subr.bf16.mxu0 0
  %438 = vmatpush1.bf16.msra.mxu0 0
  %439 = vmatprep.subr.bf16.mxu0 0
  %440 = vmatpush1.bf16.msra.mxu0 0
  %441 = vmatprep.subr.bf16.mxu0 0
  %442 = vmatpush1.bf16.msra.mxu0 0
  %443 = vmatprep.subr.bf16.mxu0 0
  %444 = vmatpush1.bf16.msra.mxu0 0
  %445 = vmatprep.subr.bf16.mxu0 0
  %446 = vmatpush1.bf16.msra.mxu0 0
  %447 = vmatprep.subr.bf16.mxu0 0
  %448 = vmatpush1.bf16.msra.mxu0 0
  %449 = vmatprep.subr.bf16.mxu0 0
  %450 = vmatpush1.bf16.msra.mxu0 0
  %451 = vmatprep.subr.bf16.mxu0 0
  %452 = vmatpush1.bf16.msra.mxu0 0
  %453 = vmatprep.subr.bf16.mxu0 0
  %454 = vmatpush1.bf16.msra.mxu0 0
  %455 = vmatprep.subr.bf16.mxu0 0
  %456 = vmatpush1.bf16.msra.mxu0 0
  %457 = vmatprep.subr.bf16.mxu0 0
  %458 = vmatpush1.bf16.msra.mxu0 0
  %459 = vmatprep.mubr.bf16.mxu0 0
  %460 = vmatmul.mubr.bf16.gmra.mrb[0].mxu0 %v401
  %v461 = vpop.f32.mrb[0].mxu0
  %v462 = vadd.f32 0.0, %v461
  %v463 = vpop.f32.mrb[0].mxu0
  %v464 = vpop.f32.mrb[0].mxu0
  %v465 = vadd.f32 0.0, %v464
  %v466 = vpop.f32.mrb[0].mxu0
  %467 = vmatprep.mubr.bf16.mxu0 0
  %468 = vmatmul.mubr.bf16.gmra.mrb[0].mxu0 %v404
  %v469 = vpop.f32.mrb[0].mxu0
  %v470 = vadd.f32 0.0, %v469
  %v471 = vpop.f32.mrb[0].mxu0
  %v472 = vpop.f32.mrb[0].mxu0
  %v473 = vadd.f32 0.0, %v472
  %v474 = vpop.f32.mrb[0].mxu0
  %475 = vmatprep.mubr.bf16.mxu0 0
  %476 = vmatmul.mubr.bf16.gmra.mrb[0].mxu0 %v407
  %v477 = vpop.f32.mrb[0].mxu0
  %v478 = vadd.f32 0.0, %v477
  %v479 = vpop.f32.mrb[0].mxu0
  %v480 = vpop.f32.mrb[0].mxu0
  %v481 = vadd.f32 0.0, %v480
  %v482 = vpop.f32.mrb[0].mxu0
  %483 = vmatprep.mubr.bf16.mxu0 0
  %484 = vmatmul.mubr.bf16.gmra.mrb[0].mxu0 %v410
  %v485 = vpop.f32.mrb[0].mxu0
  %v486 = vadd.f32 0.0, %v485
  %v487 = vpop.f32.mrb[0].mxu0
  %v488 = vpop.f32.mrb[0].mxu0
  %v489 = vadd.f32 0.0, %v488
  %v490 = vpop.f32.mrb[0].mxu0
  %491 = vmatprep.mubr.bf16.mxu0 0
  %492 = vmatmul.mubr.bf16.gmra.mrb[0].mxu0 %v413
  %v493 = vpop.f32.mrb[0].mxu0
  %v494 = vadd.f32 0.0, %v493
  %v495 = vpop.f32.mrb[0].mxu0
  %v496 = vpop.f32.mrb[0].mxu0
  %v497 = vadd.f32 0.0, %v496
  %v498 = vpop.f32.mrb[0].mxu0
  %499 = vmatprep.mubr.bf16.mxu0 0
  %500 = vmatmul.mubr.bf16.gmra.mrb[0].mxu0 %v416
  %v501 = vpop.f32.mrb[0].mxu0
  %v502 = vadd.f32 0.0, %v501
  %v503 = vpop.f32.mrb[0].mxu0
  %v504 = vpop.f32.mrb[0].mxu0
  %v505 = vadd.f32 0.0, %v504
  %v506 = vpop.f32.mrb[0].mxu0
  %507 = vmatprep.mubr.bf16.mxu0 0
  %508 = vmatmul.mubr.bf16.gmra.mrb[0].mxu0 %v419
  %v509 = vpop.f32.mrb[0].mxu0
  %v510 = vadd.f32 0.0, %v509
  %v511 = vpop.f32.mrb[0].mxu0
  %v512 = vpop.f32.mrb[0].mxu0
  %v513 = vadd.f32 0.0, %v512
  %v514 = vpop.f32.mrb[0].mxu0
  %515 = vmatprep.mubr.bf16.mxu0 0
  %516 = vmatmul.mubr.bf16.gmra.mrb[0].mxu0 %v422
  %v517 = vpop.f32.mrb[0].mxu0
  %v518 = vadd.f32 0.0, %v517
  %v519 = vpop.f32.mrb[0].mxu0
  %v520 = vpop.f32.mrb[0].mxu0
  %v521 = vadd.f32 0.0, %v520
  %v522 = vpop.f32.mrb[0].mxu0
  %523 = vdwg.mxu0
  %vm524 = vcmask 15360
  %525 = vst.msk [vmem:[%s4] sm:$0xff] %vm524, %v462
  %526 = vst.msk [vmem:[%s4 + $0x8] sm:$0xff] %vm524, %v465
  %527 = vst.msk [vmem:[%s4 + $0x10] sm:$0xff] %vm524, %v470
  %528 = vst.msk [vmem:[%s4 + $0x18] sm:$0xff] %vm524, %v473
  %529 = vst.msk [vmem:[%s4 + $0x20] sm:$0xff] %vm524, %v478
  %530 = vst.msk [vmem:[%s4 + $0x28] sm:$0xff] %vm524, %v481
  %531 = vst.msk [vmem:[%s4 + $0x30] sm:$0xff] %vm524, %v486
  %532 = vst.msk [vmem:[%s4 + $0x38] sm:$0xff] %vm524, %v489
  %533 = vst.msk [vmem:[%s4 + $0x40] sm:$0xff] %vm524, %v494
  %534 = vst.msk [vmem:[%s4 + $0x48] sm:$0xff] %vm524, %v497
  %535 = vst.msk [vmem:[%s4 + $0x50] sm:$0xff] %vm524, %v502
  %536 = vst.msk [vmem:[%s4 + $0x58] sm:$0xff] %vm524, %v505
  %537 = vst.msk [vmem:[%s4 + $0x60] sm:$0xff] %vm524, %v510
  %538 = vst.msk [vmem:[%s4 + $0x68] sm:$0xff] %vm524, %v513
  %539 = vst.msk [vmem:[%s4 + $0x70] sm:$0xff] %vm524, %v518
  %540 = vst.msk [vmem:[%s4 + $0x78] sm:$0xff] %vm524, %v521
  %v541 = vld [vmem:[%s0 + $0x80] sm:$0xff]
  %v542 = vld [vmem:[%s0 + $0x88] sm:$0xff]
  %v543 = vld [vmem:[%s0 + $0x90] sm:$0xff]
  %v544 = vld [vmem:[%s0 + $0x98] sm:$0xff]
  %v545 = vld [vmem:[%s0 + $0xa0] sm:$0xff]
  %v546 = vld [vmem:[%s0 + $0xa8] sm:$0xff]
  %v547 = vld [vmem:[%s0 + $0xb0] sm:$0xff]
  %v548 = vld [vmem:[%s0 + $0xb8] sm:$0xff]
  %v549 = vld [vmem:[%s0 + $0xc0] sm:$0xff]
  %v550 = vpack.c.bf16 %v542, %v541
  %v551 = vpack.c.bf16 %v544, %v543
  %v552 = vpack.c.bf16 %v546, %v545
  %v553 = vpack.c.bf16 %v548, %v547
  %v554 = vpack.c.bf16 %v549, %v549
  %v556 = vsel %vm82, %v550, 0
  %v559 = vsel %vm82, %v551, 0
  %v562 = vsel %vm82, %v552, 0
  %v565 = vsel %vm82, %v553, 0
  %v568 = vsel %vm82, %v554, 0
  %570 = vmatprep.subr.bf16.mxu0 0
  %571 = vmatpush1.bf16.msra.mxu0 %v74
  %572 = vmatprep.subr.bf16.mxu0 0
  %573 = vmatpush1.bf16.msra.mxu0 %v75
  %574 = vmatprep.subr.bf16.mxu0 0
  %575 = vmatpush1.bf16.msra.mxu0 %v76
  %576 = vmatprep.subr.bf16.mxu0 0
  %577 = vmatpush1.bf16.msra.mxu0 %v77
  %578 = vmatprep.subr.bf16.mxu0 0
  %579 = vmatpush1.bf16.msra.mxu0 0
  %580 = vmatprep.subr.bf16.mxu0 0
  %581 = vmatpush1.bf16.msra.mxu0 0
  %582 = vmatprep.subr.bf16.mxu0 0
  %583 = vmatpush1.bf16.msra.mxu0 0
  %584 = vmatprep.subr.bf16.mxu0 0
  %585 = vmatpush1.bf16.msra.mxu0 0
  %586 = vmatprep.subr.bf16.mxu0 0
  %587 = vmatpush1.bf16.msra.mxu0 0
  %588 = vmatprep.subr.bf16.mxu0 0
  %589 = vmatpush1.bf16.msra.mxu0 0
  %590 = vmatprep.subr.bf16.mxu0 0
  %591 = vmatpush1.bf16.msra.mxu0 0
  %592 = vmatprep.subr.bf16.mxu0 0
  %593 = vmatpush1.bf16.msra.mxu0 0
  %594 = vmatprep.subr.bf16.mxu0 0
  %595 = vmatpush1.bf16.msra.mxu0 0
  %596 = vmatprep.subr.bf16.mxu0 0
  %597 = vmatpush1.bf16.msra.mxu0 0
  %598 = vmatprep.subr.bf16.mxu0 0
  %599 = vmatpush1.bf16.msra.mxu0 0
  %600 = vmatprep.subr.bf16.mxu0 0
  %601 = vmatpush1.bf16.msra.mxu0 0
  %602 = vmatprep.mubr.bf16.mxu0 0
  %603 = vmatmul.mubr.bf16.gmra.mrb[0].mxu0 %v556
  %v604 = vpop.f32.mrb[0].mxu0
  %v605 = vadd.f32 0.0, %v604
  %v606 = vpop.f32.mrb[0].mxu0
  %v607 = vpop.f32.mrb[0].mxu0
  %v608 = vadd.f32 0.0, %v607
  %v609 = vpop.f32.mrb[0].mxu0
  %610 = vmatprep.mubr.bf16.mxu0 0
  %611 = vmatmul.mubr.bf16.gmra.mrb[0].mxu0 %v559
  %v612 = vpop.f32.mrb[0].mxu0
  %v613 = vadd.f32 0.0, %v612
  %v614 = vpop.f32.mrb[0].mxu0
  %v615 = vpop.f32.mrb[0].mxu0
  %v616 = vadd.f32 0.0, %v615
  %v617 = vpop.f32.mrb[0].mxu0
  %618 = vmatprep.mubr.bf16.mxu0 0
  %619 = vmatmul.mubr.bf16.gmra.mrb[0].mxu0 %v562
  %v620 = vpop.f32.mrb[0].mxu0
  %v621 = vadd.f32 0.0, %v620
  %v622 = vpop.f32.mrb[0].mxu0
  %v623 = vpop.f32.mrb[0].mxu0
  %v624 = vadd.f32 0.0, %v623
  %v625 = vpop.f32.mrb[0].mxu0
  %626 = vmatprep.mubr.bf16.mxu0 0
  %627 = vmatmul.mubr.bf16.gmra.mrb[0].mxu0 %v565
  %v628 = vpop.f32.mrb[0].mxu0
  %v629 = vadd.f32 0.0, %v628
  %v630 = vpop.f32.mrb[0].mxu0
  %v631 = vpop.f32.mrb[0].mxu0
  %v632 = vadd.f32 0.0, %v631
  %v633 = vpop.f32.mrb[0].mxu0
  %634 = vmatprep.mubr.bf16.mxu0 0
  %635 = vmatmul.mubr.bf16.gmra.mrb[0].mxu0 %v568
  %v636 = vpop.f32.mrb[0].mxu0
  %v637 = vadd.f32 0.0, %v636
  %v638 = vpop.f32.mrb[0].mxu0
  %v639 = vpop.f32.mrb[0].mxu0
  %v640 = vpop.f32.mrb[0].mxu0
  %641 = vdwg.mxu0
  %v642 = vmax.f32 %v605, 0.0
  %v643 = vmax.f32 %v608, 0.0
  %v644 = vmax.f32 %v613, 0.0
  %v645 = vmax.f32 %v616, 0.0
  %v646 = vmax.f32 %v621, 0.0
  %v647 = vmax.f32 %v624, 0.0
  %v648 = vmax.f32 %v629, 0.0
  %v649 = vmax.f32 %v632, 0.0
  %v650 = vmax.f32 %v637, 0.0
  %v651 = vpack.c.bf16 %v643, %v642
  %v652 = vpack.c.bf16 %v645, %v644
  %v653 = vpack.c.bf16 %v647, %v646
  %v654 = vpack.c.bf16 %v649, %v648
  %v655 = vpack.c.bf16 %v650, %v650
  %v657 = vsel %vm239, %v651, 0
  %v660 = vsel %vm239, %v652, 0
  %v663 = vsel %vm239, %v653, 0
  %v666 = vsel %vm239, %v654, 0
  %v669 = vsel %vm239, %v655, 0
  %671 = vmatprep.subr.bf16.mxu0 0
  %672 = vmatpush1.bf16.msra.mxu0 %v236
  %673 = vmatprep.subr.bf16.mxu0 0
  %674 = vmatpush1.bf16.msra.mxu0 %v266
  %675 = vmatprep.subr.bf16.mxu0 0
  %676 = vmatpush1.bf16.msra.mxu0 0
  %677 = vmatprep.subr.bf16.mxu0 0
  %678 = vmatpush1.bf16.msra.mxu0 0
  %679 = vmatprep.subr.bf16.mxu0 0
  %680 = vmatpush1.bf16.msra.mxu0 0
  %681 = vmatprep.subr.bf16.mxu0 0
  %682 = vmatpush1.bf16.msra.mxu0 0
  %683 = vmatprep.subr.bf16.mxu0 0
  %684 = vmatpush1.bf16.msra.mxu0 0
  %685 = vmatprep.subr.bf16.mxu0 0
  %686 = vmatpush1.bf16.msra.mxu0 0
  %687 = vmatprep.subr.bf16.mxu0 0
  %688 = vmatpush1.bf16.msra.mxu0 0
  %689 = vmatprep.subr.bf16.mxu0 0
  %690 = vmatpush1.bf16.msra.mxu0 0
  %691 = vmatprep.subr.bf16.mxu0 0
  %692 = vmatpush1.bf16.msra.mxu0 0
  %693 = vmatprep.subr.bf16.mxu0 0
  %694 = vmatpush1.bf16.msra.mxu0 0
  %695 = vmatprep.subr.bf16.mxu0 0
  %696 = vmatpush1.bf16.msra.mxu0 0
  %697 = vmatprep.subr.bf16.mxu0 0
  %698 = vmatpush1.bf16.msra.mxu0 0
  %699 = vmatprep.subr.bf16.mxu0 0
  %700 = vmatpush1.bf16.msra.mxu0 0
  %701 = vmatprep.subr.bf16.mxu0 0
  %702 = vmatpush1.bf16.msra.mxu0 0
  %703 = vmatprep.mubr.bf16.mxu0 0
  %704 = vmatmul.mubr.bf16.gmra.mrb[0].mxu0 %v657
  %v705 = vpop.f32.mrb[0].mxu0
  %v706 = vadd.f32 0.0, %v705
  %v707 = vpop.f32.mrb[0].mxu0
  %v708 = vpop.f32.mrb[0].mxu0
  %v709 = vadd.f32 0.0, %v708
  %v710 = vpop.f32.mrb[0].mxu0
  %711 = vmatprep.mubr.bf16.mxu0 0
  %712 = vmatmul.mubr.bf16.gmra.mrb[0].mxu0 %v660
  %v713 = vpop.f32.mrb[0].mxu0
  %v714 = vadd.f32 0.0, %v713
  %v715 = vpop.f32.mrb[0].mxu0
  %v716 = vpop.f32.mrb[0].mxu0
  %v717 = vadd.f32 0.0, %v716
  %v718 = vpop.f32.mrb[0].mxu0
  %719 = vmatprep.mubr.bf16.mxu0 0
  %720 = vmatmul.mubr.bf16.gmra.mrb[0].mxu0 %v663
  %v721 = vpop.f32.mrb[0].mxu0
  %v722 = vadd.f32 0.0, %v721
  %v723 = vpop.f32.mrb[0].mxu0
  %v724 = vpop.f32.mrb[0].mxu0
  %v725 = vadd.f32 0.0, %v724
  %v726 = vpop.f32.mrb[0].mxu0
  %727 = vmatprep.mubr.bf16.mxu0 0
  %728 = vmatmul.mubr.bf16.gmra.mrb[0].mxu0 %v666
  %v729 = vpop.f32.mrb[0].mxu0
  %v730 = vadd.f32 0.0, %v729
  %v731 = vpop.f32.mrb[0].mxu0
  %v732 = vpop.f32.mrb[0].mxu0
  %v733 = vadd.f32 0.0, %v732
  %v734 = vpop.f32.mrb[0].mxu0
  %735 = vmatprep.mubr.bf16.mxu0 0
  %736 = vmatmul.mubr.bf16.gmra.mrb[0].mxu0 %v669
  %v737 = vpop.f32.mrb[0].mxu0
  %v738 = vadd.f32 0.0, %v737
  %v739 = vpop.f32.mrb[0].mxu0
  %v740 = vpop.f32.mrb[0].mxu0
  %v741 = vpop.f32.mrb[0].mxu0
  %742 = vdwg.mxu0
  %v743 = vmax.f32 %v706, 0.0
  %v744 = vmax.f32 %v709, 0.0
  %v745 = vmax.f32 %v714, 0.0
  %v746 = vmax.f32 %v717, 0.0
  %v747 = vmax.f32 %v722, 0.0
  %v748 = vmax.f32 %v725, 0.0
  %v749 = vmax.f32 %v730, 0.0
  %v750 = vmax.f32 %v733, 0.0
  %v751 = vmax.f32 %v738, 0.0
  %v752 = vpack.c.bf16 %v744, %v743
  %v753 = vpack.c.bf16 %v746, %v745
  %v754 = vpack.c.bf16 %v748, %v747
  %v755 = vpack.c.bf16 %v750, %v749
  %v756 = vpack.c.bf16 %v751, %v751
  %v758 = vsel %vm239, %v752, 0
  %v761 = vsel %vm239, %v753, 0
  %v764 = vsel %vm239, %v754, 0
  %v767 = vsel %vm239, %v755, 0
  %v770 = vsel %vm239, %v756, 0
  %772 = vmatprep.subr.bf16.mxu0 0
  %773 = vmatpush1.bf16.msra.mxu0 %v397
  %774 = vmatprep.subr.bf16.mxu0 0
  %775 = vmatpush1.bf16.msra.mxu0 %v425
  %776 = vmatprep.subr.bf16.mxu0 0
  %777 = vmatpush1.bf16.msra.mxu0 0
  %778 = vmatprep.subr.bf16.mxu0 0
  %779 = vmatpush1.bf16.msra.mxu0 0
  %780 = vmatprep.subr.bf16.mxu0 0
  %781 = vmatpush1.bf16.msra.mxu0 0
  %782 = vmatprep.subr.bf16.mxu0 0
  %783 = vmatpush1.bf16.msra.mxu0 0
  %784 = vmatprep.subr.bf16.mxu0 0
  %785 = vmatpush1.bf16.msra.mxu0 0
  %786 = vmatprep.subr.bf16.mxu0 0
  %787 = vmatpush1.bf16.msra.mxu0 0
  %788 = vmatprep.subr.bf16.mxu0 0
  %789 = vmatpush1.bf16.msra.mxu0 0
  %790 = vmatprep.subr.bf16.mxu0 0
  %791 = vmatpush1.bf16.msra.mxu0 0
  %792 = vmatprep.subr.bf16.mxu0 0
  %793 = vmatpush1.bf16.msra.mxu0 0
  %794 = vmatprep.subr.bf16.mxu0 0
  %795 = vmatpush1.bf16.msra.mxu0 0
  %796 = vmatprep.subr.bf16.mxu0 0
  %797 = vmatpush1.bf16.msra.mxu0 0
  %798 = vmatprep.subr.bf16.mxu0 0
  %799 = vmatpush1.bf16.msra.mxu0 0
  %800 = vmatprep.subr.bf16.mxu0 0
  %801 = vmatpush1.bf16.msra.mxu0 0
  %802 = vmatprep.subr.bf16.mxu0 0
  %803 = vmatpush1.bf16.msra.mxu0 0
  %804 = vmatprep.mubr.bf16.mxu0 0
  %805 = vmatmul.mubr.bf16.gmra.mrb[0].mxu0 %v758
  %v806 = vpop.f32.mrb[0].mxu0
  %v807 = vadd.f32 0.0, %v806
  %v808 = vpop.f32.mrb[0].mxu0
  %v809 = vpop.f32.mrb[0].mxu0
  %v810 = vadd.f32 0.0, %v809
  %v811 = vpop.f32.mrb[0].mxu0
  %812 = vmatprep.mubr.bf16.mxu0 0
  %813 = vmatmul.mubr.bf16.gmra.mrb[0].mxu0 %v761
  %v814 = vpop.f32.mrb[0].mxu0
  %v815 = vadd.f32 0.0, %v814
  %v816 = vpop.f32.mrb[0].mxu0
  %v817 = vpop.f32.mrb[0].mxu0
  %v818 = vadd.f32 0.0, %v817
  %v819 = vpop.f32.mrb[0].mxu0
  %820 = vmatprep.mubr.bf16.mxu0 0
  %821 = vmatmul.mubr.bf16.gmra.mrb[0].mxu0 %v764
  %v822 = vpop.f32.mrb[0].mxu0
  %v823 = vadd.f32 0.0, %v822
  %v824 = vpop.f32.mrb[0].mxu0
  %v825 = vpop.f32.mrb[0].mxu0
  %v826 = vadd.f32 0.0, %v825
  %v827 = vpop.f32.mrb[0].mxu0
  %828 = vmatprep.mubr.bf16.mxu0 0
  %829 = vmatmul.mubr.bf16.gmra.mrb[0].mxu0 %v767
  %v830 = vpop.f32.mrb[0].mxu0
  %v831 = vadd.f32 0.0, %v830
  %v832 = vpop.f32.mrb[0].mxu0
  %v833 = vpop.f32.mrb[0].mxu0
  %v834 = vadd.f32 0.0, %v833
  %v835 = vpop.f32.mrb[0].mxu0
  %836 = vmatprep.mubr.bf16.mxu0 0
  %837 = vmatmul.mubr.bf16.gmra.mrb[0].mxu0 %v770
  %v838 = vpop.f32.mrb[0].mxu0
  %v839 = vadd.f32 0.0, %v838
  %v840 = vpop.f32.mrb[0].mxu0
  %v841 = vpop.f32.mrb[0].mxu0
  %v842 = vpop.f32.mrb[0].mxu0
  %843 = vdwg.mxu0
  %844 = vst.msk [vmem:[%s4 + $0x80] sm:$0xff] %vm524, %v807
  %845 = vst.msk [vmem:[%s4 + $0x88] sm:$0xff] %vm524, %v810
  %846 = vst.msk [vmem:[%s4 + $0x90] sm:$0xff] %vm524, %v815
  %847 = vst.msk [vmem:[%s4 + $0x98] sm:$0xff] %vm524, %v818
  %848 = vst.msk [vmem:[%s4 + $0xa0] sm:$0xff] %vm524, %v823
  %849 = vst.msk [vmem:[%s4 + $0xa8] sm:$0xff] %vm524, %v826
  %850 = vst.msk [vmem:[%s4 + $0xb0] sm:$0xff] %vm524, %v831
  %851 = vst.msk [vmem:[%s4 + $0xb8] sm:$0xff] %vm524, %v834
  %852 = vst.msk [vmem:[%s4 + $0xc0] sm:$0xff] %vm524, %v839
  // Predicated region
  $region18: #{fcnet_forward.1} parent=0 // pred_check
    _
  $region19: #{fcnet_forward.1} parent=0 // pred_check_branch
    %854 = sbr.rel (0) target = $region21
  $region20: #{fcnet_forward.1} parent=0 // pred_region
    _
  $region21: #{fcnet_forward.1} parent=0 // pred_fallthru
    _
  // Predicated region
  $region22: #{fcnet_forward.1} parent=0 // pred_check
    _
  $region23: #{fcnet_forward.1} parent=0 // pred_check_branch
    %856 = sbr.rel (0) target = $region25
  $region24: #{fcnet_forward.1} parent=0 // pred_region
    _
  $region25: #{fcnet_forward.1} parent=0 // pred_fallthru
    _

</llo_original>
